<compile_context>
chip_gen: v6e
topology: v6e:2x2x1
jax: 0.10.0
libtpu: 0.0.40
codegen_flags: <defaults>
</compile_context>

<pallas_src>
import functools

import numpy as np
import jax
import jax.numpy as jnp
from jax import lax
from jax.experimental import pallas as pl
from jax.experimental.pallas import tpu as pltpu

K = 5
PAD = K // 2
COUT = 3
LANE = 128


@functools.cache
def _roll_matches_numpy() -> bool:
    """Portability guard: detect pltpu.roll direction (np.roll convention or not)."""
    def k(x_ref, o_ref):
        o_ref[...] = pltpu.roll(x_ref[...], 1, axis=1)

    row = np.arange(LANE, dtype=np.float32)
    x = jnp.broadcast_to(jnp.asarray(row)[None, :], (8, LANE))
    y = jax.device_get(
        pl.pallas_call(k, out_shape=jax.ShapeDtypeStruct((8, LANE), jnp.float32))(x))
    if np.array_equal(y[0], np.roll(row, 1)):
        return True
    if np.array_equal(y[0], np.roll(row, -1)):
        return False
    raise RuntimeError("unexpected pltpu.roll semantics")


def _colorizer_kernel(x_ref, w0_ref, b0_ref, w1_ref, b1_ref, w2_ref, b2_ref,
                      o_ref, act_ref, *, H, W, G, SW, LW, TH, np_roll):
    """Fused 3x (5x5 'same' conv) + broadcast-bw residual on a lane-packed block.

    x_ref   : (1, Hp, LW)  packed, zero-bordered bw planes (G images per slab)
    act_ref : (2*COUT, Hp, LW) VMEM; planes [0:3) = set A, [3:6) = set B
    o_ref   : (1, COUT, H, LW) lane-dense packed output
    """
    Hp = H + 2 * PAD
    n_tiles = H // TH

    # Zero only the 2-row top/bottom border strips of both plane sets
    # (interior rows are fully overwritten every step; columns handled below).
    act_ref[:, 0:PAD, :] = jnp.zeros((2 * COUT, PAD, LW), jnp.float32)
    act_ref[:, PAD + H:Hp, :] = jnp.zeros((2 * COUT, PAD, LW), jnp.float32)

    # 0/1 lane mask of interior image columns: zeroes inter-image borders and
    # the right-hand pad so written activations are valid 'same' padding for
    # the next layer.  Built once per step (hoisted out of all loops).
    col = lax.broadcasted_iota(jnp.int32, (TH, LW), 1)
    interior = (col >= PAD) & (col < PAD + W)
    for g in range(1, G):
        lo = g * SW + PAD
        interior = jnp.logical_or(interior, (col >= lo) & (col < lo + W))
    mask = interior.astype(jnp.float32)

    def shift_cols(slab, off):
        # result[:, j] = slab[:, j + off]   (lane rotation on the XLU)
        if off == 0:
            return slab
        s = (-off) % LW if np_roll else off % LW
        return pltpu.roll(slab, s, axis=1)

    def conv_tile(load_plane, w_ref, b_ref, cin, r0):
        # One TH-row output tile, all COUT channels, accumulators vreg-resident.
        accs = [jnp.full((TH, LW), b_ref[co], jnp.float32) for co in range(COUT)]
        for ci in range(cin):
            for kh in range(K):
                slab = load_plane(ci, r0 + kh)          # (TH, LW) aligned load
                for kw in range(K):
                    tap = shift_cols(slab, kw - PAD)    # shared by all COUT
                    base = (ci * K + kh) * K + kw
                    for co in range(COUT):
                        accs[co] = accs[co] + w_ref[co * cin * K * K + base] * tap
        return accs

    in_plane = lambda ci, r: x_ref[0, r:r + TH, :]
    a_plane = lambda ci, r: act_ref[ci, r:r + TH, :]
    b_plane = lambda ci, r: act_ref[COUT + ci, r:r + TH, :]

    # Layer 0: 1 -> 3, packed bw -> plane set A.
    for t in range(n_tiles):
        r0 = t * TH
        accs = conv_tile(in_plane, w0_ref, b0_ref, 1, r0)
        for c in range(COUT):
            act_ref[c, PAD + r0:PAD + r0 + TH, :] = accs[c] * mask

    # Layer 1: 3 -> 3, set A -> set B.
    for t in range(n_tiles):
        r0 = t * TH
        accs = conv_tile(a_plane, w1_ref, b1_ref, COUT, r0)
        for c in range(COUT):
            act_ref[COUT + c, PAD + r0:PAD + r0 + TH, :] = accs[c] * mask

    # Layer 2: 3 -> 3, set B -> output, fused with the cat([bw,bw,bw]) residual
    # (bw re-sliced from the resident input block only here).
    for t in range(n_tiles):
        r0 = t * TH
        accs = conv_tile(b_plane, w2_ref, b2_ref, COUT, r0)
        bw = x_ref[0, PAD + r0:PAD + r0 + TH, :]
        for c in range(COUT):
            o_ref[0, c, r0:r0 + TH, :] = accs[c] + bw


def colorizer_forward(bw, params):
    """ColorizerModel.forward: fused 3-layer conv stack + broadcast-bw residual."""
    (w0, b0), (w1, b1), (w2, b2) = params
    B, Cin, H, W = bw.shape
    assert Cin == 1

    Hp = H + 2 * PAD
    SW = W + 2 * PAD                                   # per-image padded width
    G = max(1, min(LANE // SW, B))                     # images folded per 128-lane slab
    LW = pl.cdiv(G * SW, LANE) * LANE                  # lane-dense slab width
    NBLK = pl.cdiv(B, G)                               # grid length
    Bp = NBLK * G
    TH = 8 if H % 8 == 0 else H                        # vreg-resident row tile

    np_roll = _roll_matches_numpy()

    # --- pack: (B,1,H,W) -> (NBLK, Hp, LW), each image zero-bordered in its slot.
    x = bw[:, 0].astype(jnp.float32)
    x = jnp.pad(x, ((0, Bp - B), (PAD, PAD), (PAD, PAD)))          # (Bp, Hp, SW)
    x = x.reshape(NBLK, G, Hp, SW).transpose(0, 2, 1, 3).reshape(NBLK, Hp, G * SW)
    if LW > G * SW:
        x = jnp.pad(x, ((0, 0), (0, 0), (0, LW - G * SW)))

    smem = pl.BlockSpec(memory_space=pltpu.MemorySpace.SMEM)
    kern = functools.partial(_colorizer_kernel, H=H, W=W, G=G, SW=SW, LW=LW,
                             TH=TH, np_roll=np_roll)

    # VMEM: double-buffered input/output blocks + the 6-plane activation scratch.
    block_bytes = 4 * (2 * Hp * LW + 2 * COUT * H * LW + 2 * COUT * Hp * LW)
    vmem_limit = int(min(96 << 20, max(32 << 20, 2 * block_bytes)))

    macs_per_px = K * K * (COUT * 1 + COUT * COUT + COUT * COUT)   # 525
    cost = pl.CostEstimate(flops=2 * macs_per_px * B * H * W,
                           transcendentals=0,
                           bytes_accessed=4 * (B * H * W + B * COUT * H * W))

    o_packed = pl.pallas_call(
        kern,
        out_shape=jax.ShapeDtypeStruct((NBLK, COUT, H, LW), jnp.float32),
        grid=(NBLK,),
        in_specs=[
            pl.BlockSpec((1, Hp, LW), lambda n: (n, 0, 0)),
            smem, smem, smem, smem, smem, smem,
        ],
        out_specs=pl.BlockSpec((1, COUT, H, LW), lambda n: (n, 0, 0, 0)),
        scratch_shapes=[pltpu.VMEM((2 * COUT, Hp, LW), jnp.float32)],
        compiler_params=pltpu.CompilerParams(
            dimension_semantics=("parallel",),
            vmem_limit_bytes=vmem_limit),
        cost_estimate=cost,
    )(
        x,
        w0.reshape(-1).astype(jnp.float32), b0.astype(jnp.float32),
        w1.reshape(-1).astype(jnp.float32), b1.astype(jnp.float32),
        w2.reshape(-1).astype(jnp.float32), b2.astype(jnp.float32),
    )

    # --- unpack: (NBLK, COUT, H, LW) -> (B, COUT, H, W) (layout plumbing only).
    o = o_packed[..., :G * SW].reshape(NBLK, COUT, H, G, SW)
    o = o.transpose(0, 3, 1, 2, 4).reshape(NBLK * G, COUT, H, SW)
    return o[:B, :, :, PAD:PAD + W]


def colorizer_reference(bw, params):
    """Pure-JAX reference (lax conv) for correctness check."""
    h = bw
    for w, b in params:
        h = lax.conv_general_dilated(
            h, w, window_strides=(1, 1), padding='SAME',
            dimension_numbers=('NCHW', 'OIHW', 'NCHW')) + b[None, :, None, None]
    return jnp.concatenate([bw, bw, bw], axis=1) + h


def init_params(key):
    """Deterministic init matching PyTorch Conv2d default (uniform +-1/sqrt(fan_in))."""
    shapes = [((3, 1, K, K), (3,)), ((3, 3, K, K), (3,)), ((3, 3, K, K), (3,))]
    params = []
    for (wshape, bshape) in shapes:
        key, kw, kb = jax.random.split(key, 3)
        fan_in = wshape[1] * wshape[2] * wshape[3]
        bound = 1.0 / jnp.sqrt(float(fan_in))
        w = jax.random.uniform(kw, wshape, jnp.float32, -bound, bound)
        b = jax.random.uniform(kb, bshape, jnp.float32, -bound, bound)
        params.append((w, b))
    return params


if __name__ == "__main__":
    key = jax.random.PRNGKey(0)
    key, kx = jax.random.split(key)
    # Small grayscale batch: (B=2, C=1, H=16, W=16)
    bw = jax.random.uniform(kx, (2, 1, 16, 16), jnp.float32)

    params = init_params(key)

    out = colorizer_forward(bw, params)
    out = jax.block_until_ready(out)

    ref = colorizer_reference(bw, params)
    assert out.shape == (2, 3, 16, 16)
    assert jnp.allclose(out, ref, rtol=1e-4, atol=1e-5), \
        f"max abs err {jnp.max(jnp.abs(out - ref))}"

    print("KERNEL_OK")
</pallas_src>

<mosaic_0001>
module attributes {stable_mosaic.version = 11 : i64} {
  func.func @k(%arg0: memref<8x128xf32, #tpu.memory_space<vmem>>, %arg1: memref<8x128xf32, #tpu.memory_space<vmem>>) attributes {dimension_semantics = [], scalar_prefetch = 0 : i64, scratch_operands = 0 : i64, tpu.core_type = #tpu.core_type<tc>} {
    %c0 = arith.constant 0 : index
    %c0_0 = arith.constant 0 : index
    %0 = vector.load %arg0[%c0, %c0_0] : memref<8x128xf32, #tpu.memory_space<vmem>>, vector<8x128xf32>
    %c1_i32 = arith.constant 1 : i32
    %1 = tpu.dynamic_rotate %0 by %c1_i32 dim 1 : vector<8x128xf32>, i32 -> vector<8x128xf32>
    %c0_1 = arith.constant 0 : index
    %c0_2 = arith.constant 0 : index
    %2 = vector.load %arg1[%c0_1, %c0_2] : memref<8x128xf32, #tpu.memory_space<vmem>>, vector<8x128xf32>
    tpu.vector_store %arg1[%c0_1, %c0_2], %1 {strides = array<i32>} : memref<8x128xf32, #tpu.memory_space<vmem>>, vector<8x128xf32>,
    return
  }
}

</mosaic_0001>

<llo_original>
// kernel: tpu_custom_call.1
$region0: #{tpu_custom_call.1}
  #allocation0 [shape = 'u32[]', space=smem, size = 0x4, offset = 0x4, fixed_abs, tag = 'smem constant byte address 0x4 - core index']
  #allocation1 [shape = 'u32[144,128]{1,0:T(1,128)}', space=vmem, size = 0x12000, scoped, tag = 'internal scratch']
  %s0 = inlined_call_operand.hbm [shape: f32[8,128], index: 0, kind: input, shape index: {}]
  %s1 = inlined_call_operand.hbm [shape: f32[8,128], index: 1, kind: output, shape index: {}]
  %s2 = sld [smem:[#allocation0]]
  $region18: #{tpu_custom_call.1} parent=0
    _
  %s4 = ssub.s32 1, %s2
  %s5 = scalar_select 0, %s4, %s2
  $region1: #{tpu_custom_call.1} parent=0
    #allocation2 [shape = 'u8[4096]{0}', space=vmem, size = 0x1000, scoped, tag = 'input window, operand 0, single buffered']
    #allocation3 [shape = 's32[1]{0}', space=sflag, size = 0x4, scoped, tag = 'scoped memory for tpu_custom_call.1']
    #allocation4 [shape = 's32[1]{0}', space=sflag, size = 0x4, scoped, tag = 'scoped memory for tpu_custom_call.1']
    #allocation5 [shape = 'u8[4096]{0}', space=vmem, size = 0x1000, scoped, tag = 'output window, operand 0, single buffered']
    %6 = vsyncpa [#allocation3], 0
    %7 = vsyncpa [#allocation4], 0
    // Predicated region
    $region2: #{tpu_custom_call.1} parent=1 // pred_check
      _
    $region3: #{tpu_custom_call.1} parent=1 // pred_check_branch
      %9 = sbr.rel (0) target = $region5
    $region4: #{tpu_custom_call.1} parent=1 // pred_region
      %s11 = ssub.s32 128, 128
      %12 = vsyncadd [#allocation3], %s11
      %s14 = sshll.u32 [#allocation2], 4
      %s15 = int_to_ptr.vmem [resolvable:$true] %s14
      %17 = dma.hbm_to_vmem [thread:$0]  %s0, 128, %s15, [#allocation3]
    $region5: #{tpu_custom_call.1} parent=1 // pred_fallthru
      _
    // Predicated region
    $region6: #{tpu_custom_call.1} parent=1 // pred_check
      _
    $region7: #{tpu_custom_call.1} parent=1 // pred_check_branch
      %19 = sbr.rel (0) target = $region9
    $region8: #{tpu_custom_call.1} parent=1 // pred_region
      %20 = dma.done [#allocation3], 128
    $region9: #{tpu_custom_call.1} parent=1 // pred_fallthru
      _
    %v21 = vld [vmem:[#allocation2] sm:$0xff]
    %22 = vrot.lane.b32.xlu0 %v21, 1
    %v23 = vpop.permute.xlu0 %22
    %24 = vst [vmem:[#allocation5] sm:$0xff] %v23
    // Predicated region
    $region10: #{tpu_custom_call.1} parent=1 // pred_check
      _
    $region11: #{tpu_custom_call.1} parent=1 // pred_check_branch
      %26 = sbr.rel (0) target = $region13
    $region12: #{tpu_custom_call.1} parent=1 // pred_region
      %s28 = ssub.s32 128, 128
      %29 = vsyncadd [#allocation4], %s28
      %s31 = sshll.u32 [#allocation5], 4
      %s32 = int_to_ptr.vmem [resolvable:$true] %s31
      %34 = dma.vmem_to_hbm [thread:$0]  %s32, 128, %s1, [#allocation4]
    $region13: #{tpu_custom_call.1} parent=1 // pred_fallthru
      _
    // Predicated region
    $region14: #{tpu_custom_call.1} parent=1 // pred_check
      _
    $region15: #{tpu_custom_call.1} parent=1 // pred_check_branch
      %36 = sbr.rel (0) target = $region17
    $region16: #{tpu_custom_call.1} parent=1 // pred_region
      %37 = dma.done [#allocation4], 128
    $region17: #{tpu_custom_call.1} parent=1 // pred_fallthru
      _
    %38 = vsyncpa [#allocation3], 1
    %39 = vsyncpa [#allocation4], 1

</llo_original>
